<compile_context>
chip_gen: v7x
topology: tpu7x:2x2x1
jax: 0.10.0
libtpu: 0.0.40
codegen_flags: <defaults>
</compile_context>

<pallas_src>
import functools
import numpy as np
import jax
import jax.numpy as jnp
from jax import lax
from jax.experimental import pallas as pl
from jax.experimental.pallas import tpu as pltpu


def _round_up(x, m):
    return (x + m - 1) // m * m


# ----------------------------------------------------------------------------------
# Kernel 1 (runs once, at construction): Gabor filter-bank synthesis.
# params rows: [locx, locy, sigx, sigy, cos_ori, sin_ori, freq, phase]
# Output block: (8, P) with P = imsize*imsize on the lane axis (lane-dense writes).
# ----------------------------------------------------------------------------------
def _gabor_bank_kernel(p_ref, out_ref, *, imsize):
    ch, P = out_ref.shape
    half = (imsize - 1) / 2.0

    lane = lax.broadcasted_iota(jnp.int32, (ch, P), 1).astype(jnp.float32)
    # pixel row/col from the flat index (float trick avoids integer div/rem)
    rowf = jnp.floor((lane + 0.5) / imsize)
    colf = lane - rowf * imsize
    # torch: _basegrid_x = linspace(-imsize/2+0.5, imsize/2-0.5, imsize)/imsize, _basegrid_y = -that
    xg = (colf - half) / imsize
    yg = -(rowf - half) / imsize

    p = p_ref[...]                                   # (ch, 8)
    locx, locy = p[:, 0:1], p[:, 1:2]
    sigx, sigy = p[:, 2:3], p[:, 3:4]
    cos_o, sin_o = p[:, 4:5], p[:, 5:6]
    freq, phase = p[:, 6:7], p[:, 7:8]

    xp = xg - locx
    yp = yg - locy
    pat_y = yp * cos_o - xp * sin_o
    pat_x = yp * sin_o + xp * cos_o
    xw = pat_x / sigx
    yh = pat_y / sigy
    env = jnp.exp(-0.5 * (xw * xw + yh * yh))
    out_ref[...] = env * 0.5 * jnp.cos((2.0 * np.pi) * freq * pat_y + phase)


def _generate_gabor_bank(params, imsize):
    M_pad = params.shape[0]                          # multiple of 16
    P = imsize * imsize
    CH = 8
    kern = functools.partial(_gabor_bank_kernel, imsize=imsize)
    return pl.pallas_call(
        kern,
        out_shape=jax.ShapeDtypeStruct((M_pad, P), jnp.float32),
        grid=(M_pad // CH,),
        in_specs=[pl.BlockSpec((CH, 8), lambda i: (i, 0))],
        out_specs=pl.BlockSpec((CH, P), lambda i: (i, 0)),
        compiler_params=pltpu.CompilerParams(dimension_semantics=("parallel",)),
    )(params)


# ----------------------------------------------------------------------------------
# Kernel 2 (the forward hot path): fused mixed simple + complex cell response.
#   Y  = W @ X^T                       (bf16 in, f32 acc)          -> (M, TN)
#   F  = (mask*relu(Y+b) + (1-mask)*(Y+b))^2                        -> (M, TN)
#   out = SEL @ F + output_b                                        -> (B_pad, TN)
# ----------------------------------------------------------------------------------
def _mixed_response_kernel(x_ref, w_ref, bias_ref, mask_ref, sel_ref, outb_ref, out_ref):
    y = lax.dot_general(
        w_ref[...], x_ref[...],
        dimension_numbers=(((1,), (1,)), ((), ())),
        preferred_element_type=jnp.float32)                  # (M, TN)
    z = y + bias_ref[...]                                    # simple-cell bias (0 for complex rows)
    m = mask_ref[...]                                        # 1.0 on simple rows, 0.0 on complex rows
    zr = jnp.maximum(z, 0.0)
    f = m * zr + (1.0 - m) * z                               # relu on simple rows only
    f = f * f                                                # relu(.)^2 / (.)^2
    resp = jnp.dot(sel_ref[...], f, preferred_element_type=jnp.float32)
    out_ref[...] = resp + outb_ref[...]


def _mixed_response(xb, w, bias, mask, sel, outb, TN, vmem_bytes):
    N_pad, P = xb.shape
    M = w.shape[0]
    B_pad = sel.shape[0]
    return pl.pallas_call(
        _mixed_response_kernel,
        out_shape=jax.ShapeDtypeStruct((B_pad, N_pad), jnp.float32),
        grid=(N_pad // TN,),
        in_specs=[
            pl.BlockSpec((TN, P), lambda i: (i, 0)),         # image slab, streamed over the grid
            pl.BlockSpec((M, P), lambda i: (0, 0)),          # fused gabor bank, resident
            pl.BlockSpec((M, 1), lambda i: (0, 0)),          # bias,   resident
            pl.BlockSpec((M, 1), lambda i: (0, 0)),          # mask,   resident
            pl.BlockSpec((B_pad, M), lambda i: (0, 0)),      # selector (output_a + unit sum), resident
            pl.BlockSpec((B_pad, 1), lambda i: (0, 0)),      # output_b, resident
        ],
        out_specs=pl.BlockSpec((B_pad, TN), lambda i: (0, i)),
        compiler_params=pltpu.CompilerParams(
            dimension_semantics=("parallel",),
            vmem_limit_bytes=48 * 1024 * 1024),
    )(xb, w, bias, mask, sel, outb)


# ----------------------------------------------------------------------------------
# Module wrapper: deterministic parameter setup mirroring GaborBase.__default_init /
# GaborSimpleCell / GaborComplexCell / GaborMixedCell.
# ----------------------------------------------------------------------------------
class GaborMixedCellPallas:
    def __init__(self, imsize, batch_size=1, num_simple=1, num_complex=1, seed=0,
                 max_tile_n=512):
        assert num_simple > 0 and num_complex > 0
        # TODO(synk): the num_simple==0 / num_complex==0 branches of the torch module are not specialized here.
        self.imsize = imsize
        self.P = imsize * imsize
        self.B = batch_size
        self.Us = num_simple
        self.Uc = num_complex
        rng = np.random.RandomState(seed)

        def default_init(num_unit):
            scale_factor = 0.5
            ap = 30.0 / (imsize / scale_factor)
            loc = (rng.rand(2, batch_size, num_unit) * ap - ap / 2).astype(np.float32)
            freq = (rng.rand(batch_size, num_unit) * 6 + 2).astype(np.float32)
            ori = (rng.rand(batch_size, num_unit) * np.pi).astype(np.float32)
            slo, shi = 2.0 / imsize, 4.0 / imsize
            sig = (rng.rand(2, batch_size, num_unit) * (shi - slo) + slo).astype(np.float32)
            return loc, sig, ori, freq

        # simple-cell parameters
        self.loc_s, self.sig_s, self.ori_s, self.freq_s = default_init(num_simple)
        self.phase_s = (rng.rand(batch_size, num_simple) * 2 * np.pi).astype(np.float32)
        self.bias_s = (rng.rand(batch_size, num_simple) * 0.1 - 0.05).astype(np.float32)
        self.a_s = (1.0 + 0.1 * rng.randn(batch_size, num_simple)).astype(np.float32)
        # complex-cell parameters
        self.loc_c, self.sig_c, self.ori_c, self.freq_c = default_init(num_complex)
        self.a_c = (1.0 + 0.1 * rng.randn(batch_size, num_complex)).astype(np.float32)
        # mixed-cell output bias
        self.out_b = (0.1 * rng.randn(batch_size)).astype(np.float32)

        # padded row layout: [simple | complex(phase 0) | complex(phase pi/2)]
        BUs, BUc = batch_size * num_simple, batch_size * num_complex
        BUs_pad, BUc_pad = _round_up(BUs, 16), _round_up(BUc, 16)
        M_pad = BUs_pad + 2 * BUc_pad
        B_pad = _round_up(batch_size, 8)
        self._BUs_pad, self._BUc_pad = BUs_pad, BUc_pad
        self._M_pad, self._B_pad = M_pad, B_pad

        def pack(loc, sig, ori, freq, phase, pad_to):
            n = ori.size
            blk = np.zeros((pad_to, 8), np.float32)
            blk[:n, 0] = loc[0].reshape(n)
            blk[:n, 1] = loc[1].reshape(n)
            blk[:n, 2] = sig[0].reshape(n)
            blk[:n, 3] = sig[1].reshape(n)
            blk[:n, 4] = np.cos(ori).reshape(n)
            blk[:n, 5] = np.sin(ori).reshape(n)
            blk[:n, 6] = freq.reshape(n)
            blk[:n, 7] = np.broadcast_to(np.asarray(phase, np.float32), ori.shape).reshape(n)
            blk[n:, 2] = 1.0   # benign sigma on pad rows (avoid 0/0 NaNs; selector is 0 there)
            blk[n:, 3] = 1.0
            return blk

        params = np.concatenate([
            pack(self.loc_s, self.sig_s, self.ori_s, self.freq_s, self.phase_s, BUs_pad),
            pack(self.loc_c, self.sig_c, self.ori_c, self.freq_c, 0.0, BUc_pad),
            pack(self.loc_c, self.sig_c, self.ori_c, self.freq_c, np.pi / 2, BUc_pad),
        ], axis=0)

        # Kernel 1 runs ONCE here; the bank is cached in bf16 and never rebuilt in forward.
        bank_f32 = _generate_gabor_bank(jnp.asarray(params), imsize)          # (M_pad, P) f32
        self.w = jax.block_until_ready(bank_f32.astype(jnp.bfloat16))         # (M_pad, P) bf16

        # fused post-processing constants
        bias = np.zeros((M_pad, 1), np.float32)
        bias[:BUs, 0] = self.bias_s.reshape(BUs)
        mask = np.zeros((M_pad, 1), np.float32)
        mask[:BUs_pad, 0] = 1.0
        sel = np.zeros((B_pad, M_pad), np.float32)
        for b in range(batch_size):
            sel[b, b * num_simple:(b + 1) * num_simple] = self.a_s[b]
            sel[b, BUs_pad + b * num_complex:BUs_pad + (b + 1) * num_complex] = self.a_c[b]
            sel[b, BUs_pad + BUc_pad + b * num_complex:
                   BUs_pad + BUc_pad + (b + 1) * num_complex] = self.a_c[b]
        outb = np.zeros((B_pad, 1), np.float32)
        outb[:batch_size, 0] = self.out_b

        self.bias = jnp.asarray(bias)
        self.mask = jnp.asarray(mask)
        self.sel = jnp.asarray(sel)
        self.outb = jnp.asarray(outb)

        # tile size along the image axis N (multiple of 128, sized against scoped VMEM)
        self._tn_max = self._pick_tn(self.P, M_pad, max_tile_n)

    @staticmethod
    def _pick_tn(P, M_pad, tn_max):
        budget = 24 * 1024 * 1024
        tn = max(128, _round_up(tn_max, 128))
        while tn > 128:
            need = (2 * tn * P * 2          # double-buffered bf16 image slabs
                    + M_pad * P * 2         # resident bf16 bank
                    + 8 * M_pad * tn * 4    # f32 intermediates
                    + 2 * 8 * tn * 4)       # double-buffered output
            if need <= budget:
                break
            tn //= 2
        return tn

    def __call__(self, x):
        # x: (N, 1, imsize, imsize) NCHW, like the torch module's image input
        x = jnp.asarray(x, jnp.float32)
        N = x.shape[0]
        xf = x.reshape(N, self.P)                         # (N, P); no host-side transpose
        TN = min(self._tn_max, _round_up(N, 128))
        N_pad = _round_up(N, TN)
        if N_pad != N:
            xf = jnp.pad(xf, ((0, N_pad - N), (0, 0)))
        xb = xf.astype(jnp.bfloat16)
        out = _mixed_response(xb, self.w, self.bias, self.mask, self.sel,
                              self.outb, TN, 48 * 1024 * 1024)
        return out[:self.B, :N]                           # (batch_size, N)


# ----------------------------------------------------------------------------------
# Pure numpy reference mirroring the PyTorch forward (for verification only).
# ----------------------------------------------------------------------------------
def _reference_forward(x_np, m):
    imsize, P = m.imsize, m.P
    basex = (np.linspace(-imsize / 2 + 0.5, imsize / 2 - 0.5, imsize) / imsize).astype(np.float32)
    basey = (-basex).astype(np.float32)

    def gabor(loc, sig, ori, freq, phase):
        xp = basex[None, None, :] - loc[0][:, :, None]
        yp = basey[None, None, :] - loc[1][:, :, None]
        c = np.cos(ori)[:, :, None, None]
        s = np.sin(ori)[:, :, None, None]
        ye = yp[:, :, :, None]
        xe = xp[:, :, None, :]
        pat_y = ye * c - xe * s
        pat_x = ye * s + xe * c
        xw = pat_x / sig[0][:, :, None, None]
        yh = pat_y / sig[1][:, :, None, None]
        env = np.exp(-0.5 * xw * xw - 0.5 * yh * yh)
        if np.ndim(phase) == 2:
            phase = phase[:, :, None, None]
        return env * 0.5 * np.cos(2 * np.pi * freq[:, :, None, None] * pat_y + phase)

    xr = x_np.reshape(-1, P).astype(np.float32)
    gs = gabor(m.loc_s, m.sig_s, m.ori_s, m.freq_s, m.phase_s).reshape(m.B, m.Us, P)
    out_s = np.einsum('np,bup->bun', xr, gs) + m.bias_s[:, :, None]
    out_s = np.maximum(out_s, 0.0) ** 2
    resp_s = (out_s * m.a_s[:, :, None]).sum(axis=1)
    g1 = gabor(m.loc_c, m.sig_c, m.ori_c, m.freq_c, 0.0).reshape(m.B, m.Uc, P)
    g2 = gabor(m.loc_c, m.sig_c, m.ori_c, m.freq_c, np.pi / 2).reshape(m.B, m.Uc, P)
    o1 = np.einsum('np,bup->bun', xr, g1)
    o2 = np.einsum('np,bup->bun', xr, g2)
    resp_c = ((o1 ** 2 + o2 ** 2) * m.a_c[:, :, None]).sum(axis=1)
    return resp_s + resp_c + m.out_b[:, None]


if __name__ == "__main__":
    imsize, batch_size, num_simple, num_complex, n_images = 16, 2, 3, 2, 8
    model = GaborMixedCellPallas(imsize, batch_size=batch_size,
                                 num_simple=num_simple, num_complex=num_complex, seed=0)
    key = jax.random.PRNGKey(0)
    x = jax.random.normal(key, (n_images, 1, imsize, imsize), dtype=jnp.float32)

    out = model(x)
    out = jax.block_until_ready(out)
    assert out.shape == (batch_size, n_images)

    ref = _reference_forward(np.asarray(x), model)
    # tolerance covers bf16-in / f32-acc MXU matmuls (per perf review) vs the f32 numpy reference
    np.testing.assert_allclose(np.asarray(out), ref, rtol=3e-2, atol=3e-2)
    print("KERNEL_OK")
</pallas_src>

<mosaic_0001>
module attributes {stable_mosaic.version = 11 : i64} {
  func.func @_gabor_bank_kernel(%arg0: i32, %arg1: memref<8x8xf32, #tpu.memory_space<vmem>>, %arg2: memref<8x256xf32, #tpu.memory_space<vmem>>) attributes {dimension_semantics = [#tpu.dimension_semantics<parallel>], iteration_bounds = array<i64: 6>, scalar_prefetch = 0 : i64, scratch_operands = 0 : i64, tpu.core_type = #tpu.core_type<tc>, window_params = [{transform_indices = @transform_0, window_bounds = array<i64: 8, 8>}, {transform_indices = @transform_1, window_bounds = array<i64: 8, 256>}]} {
    %0 = tpu.iota {dimensions = array<i32: 1>} : vector<8x256xi32>
    %1 = arith.sitofp %0 : vector<8x256xi32> to vector<8x256xf32>
    %cst = arith.constant 5.000000e-01 : f32
    %2 = vector.broadcast %cst : f32 to vector<8x256xf32>
    %3 = arith.addf %1, %2 : vector<8x256xf32>
    %cst_0 = arith.constant 1.600000e+01 : f32
    %4 = vector.broadcast %cst_0 : f32 to vector<8x256xf32>
    %5 = arith.divf %3, %4 : vector<8x256xf32>
    %6 = math.floor %5 : vector<8x256xf32>
    %cst_1 = arith.constant 1.600000e+01 : f32
    %7 = vector.broadcast %cst_1 : f32 to vector<8x256xf32>
    %8 = arith.mulf %6, %7 : vector<8x256xf32>
    %9 = arith.subf %1, %8 : vector<8x256xf32>
    %cst_2 = arith.constant 7.500000e+00 : f32
    %10 = vector.broadcast %cst_2 : f32 to vector<8x256xf32>
    %11 = arith.subf %9, %10 : vector<8x256xf32>
    %cst_3 = arith.constant 1.600000e+01 : f32
    %12 = vector.broadcast %cst_3 : f32 to vector<8x256xf32>
    %13 = arith.divf %11, %12 : vector<8x256xf32>
    %cst_4 = arith.constant 7.500000e+00 : f32
    %14 = vector.broadcast %cst_4 : f32 to vector<8x256xf32>
    %15 = arith.subf %6, %14 : vector<8x256xf32>
    %cst_5 = arith.constant 0.000000e+00 : f32
    %16 = vector.broadcast %cst_5 : f32 to vector<8x256xf32>
    %17 = arith.subf %16, %15 : vector<8x256xf32>
    %cst_6 = arith.constant 1.600000e+01 : f32
    %18 = vector.broadcast %cst_6 : f32 to vector<8x256xf32>
    %19 = arith.divf %17, %18 : vector<8x256xf32>
    %c0 = arith.constant 0 : index
    %c0_7 = arith.constant 0 : index
    %20 = vector.load %arg1[%c0, %c0_7] : memref<8x8xf32, #tpu.memory_space<vmem>>, vector<8x8xf32>
    %21 = vector.extract_strided_slice %20 {offsets = [0, 0], sizes = [8, 1], strides = [1, 1]} : vector<8x8xf32> to vector<8x1xf32>
    %22 = vector.extract_strided_slice %20 {offsets = [0, 1], sizes = [8, 1], strides = [1, 1]} : vector<8x8xf32> to vector<8x1xf32>
    %23 = vector.extract_strided_slice %20 {offsets = [0, 2], sizes = [8, 1], strides = [1, 1]} : vector<8x8xf32> to vector<8x1xf32>
    %24 = vector.extract_strided_slice %20 {offsets = [0, 3], sizes = [8, 1], strides = [1, 1]} : vector<8x8xf32> to vector<8x1xf32>
    %25 = vector.extract_strided_slice %20 {offsets = [0, 4], sizes = [8, 1], strides = [1, 1]} : vector<8x8xf32> to vector<8x1xf32>
    %26 = vector.extract_strided_slice %20 {offsets = [0, 5], sizes = [8, 1], strides = [1, 1]} : vector<8x8xf32> to vector<8x1xf32>
    %27 = vector.extract_strided_slice %20 {offsets = [0, 6], sizes = [8, 1], strides = [1, 1]} : vector<8x8xf32> to vector<8x1xf32>
    %28 = vector.extract_strided_slice %20 {offsets = [0, 7], sizes = [8, 1], strides = [1, 1]} : vector<8x8xf32> to vector<8x1xf32>
    %29 = vector.broadcast %21 : vector<8x1xf32> to vector<8x256xf32>
    %30 = arith.subf %13, %29 : vector<8x256xf32>
    %31 = vector.broadcast %22 : vector<8x1xf32> to vector<8x256xf32>
    %32 = arith.subf %19, %31 : vector<8x256xf32>
    %33 = vector.broadcast %25 : vector<8x1xf32> to vector<8x256xf32>
    %34 = arith.mulf %32, %33 : vector<8x256xf32>
    %35 = vector.broadcast %26 : vector<8x1xf32> to vector<8x256xf32>
    %36 = arith.mulf %30, %35 : vector<8x256xf32>
    %37 = arith.subf %34, %36 : vector<8x256xf32>
    %38 = vector.broadcast %26 : vector<8x1xf32> to vector<8x256xf32>
    %39 = arith.mulf %32, %38 : vector<8x256xf32>
    %40 = vector.broadcast %25 : vector<8x1xf32> to vector<8x256xf32>
    %41 = arith.mulf %30, %40 : vector<8x256xf32>
    %42 = arith.addf %39, %41 : vector<8x256xf32>
    %43 = vector.broadcast %23 : vector<8x1xf32> to vector<8x256xf32>
    %44 = arith.divf %42, %43 : vector<8x256xf32>
    %45 = vector.broadcast %24 : vector<8x1xf32> to vector<8x256xf32>
    %46 = arith.divf %37, %45 : vector<8x256xf32>
    %47 = arith.mulf %44, %44 : vector<8x256xf32>
    %48 = arith.mulf %46, %46 : vector<8x256xf32>
    %49 = arith.addf %47, %48 : vector<8x256xf32>
    %cst_8 = arith.constant -5.000000e-01 : f32
    %50 = vector.broadcast %cst_8 : f32 to vector<8x256xf32>
    %51 = arith.mulf %50, %49 : vector<8x256xf32>
    %52 = math.exp %51 : vector<8x256xf32>
    %cst_9 = arith.constant 5.000000e-01 : f32
    %53 = vector.broadcast %cst_9 : f32 to vector<8x256xf32>
    %54 = arith.mulf %52, %53 : vector<8x256xf32>
    %cst_10 = arith.constant 6.28318548 : f32
    %55 = vector.broadcast %cst_10 : f32 to vector<8x1xf32>
    %56 = arith.mulf %55, %27 : vector<8x1xf32>
    %57 = vector.broadcast %56 : vector<8x1xf32> to vector<8x256xf32>
    %58 = arith.mulf %57, %37 : vector<8x256xf32>
    %59 = vector.broadcast %28 : vector<8x1xf32> to vector<8x256xf32>
    %60 = arith.addf %58, %59 : vector<8x256xf32>
    %61 = math.cos %60 : vector<8x256xf32>
    %62 = arith.mulf %54, %61 : vector<8x256xf32>
    %c0_11 = arith.constant 0 : index
    %c0_12 = arith.constant 0 : index
    %63 = vector.load %arg2[%c0_11, %c0_12] : memref<8x256xf32, #tpu.memory_space<vmem>>, vector<8x256xf32>
    tpu.vector_store %arg2[%c0_11, %c0_12], %62 {strides = array<i32>} : memref<8x256xf32, #tpu.memory_space<vmem>>, vector<8x256xf32>,
    return
  }
  func.func @transform_0(%arg0: i32) -> (i32, i32) {
    %c0_i32 = arith.constant 0 : i32
    %c0_i32_0 = arith.constant 0 : i32
    return %arg0, %c0_i32 : i32, i32
  }
  func.func @transform_1(%arg0: i32) -> (i32, i32) {
    %c0_i32 = arith.constant 0 : i32
    %c0_i32_0 = arith.constant 0 : i32
    return %arg0, %c0_i32 : i32, i32
  }
}

</mosaic_0001>

<llo_original>
// kernel: tpu_custom_call.1
$region0: #{tpu_custom_call.1}
  #allocation0 [shape = 'u32[]', space=smem, size = 0x4, offset = 0x4, fixed_abs, tag = 'smem constant byte address 0x4 - core index']
  #allocation1 [shape = 'u32[144,128]{1,0:T(1,128)}', space=vmem, size = 0x12000, scoped, tag = 'internal scratch']
  %s0 = inlined_call_operand.vmem [shape: f32[48,8], index: 0, kind: input, shape index: {}]
  %s1 = inlined_call_operand.hbm [shape: f32[48,256], index: 1, kind: output, shape index: {}]
  %s2 = sld [smem:[#allocation0]]
  $region37: #{tpu_custom_call.1} parent=0
    _
  %s4 = ssub.s32 1, %s2
  %s5 = scalar_select 0, %s4, %s2
  $region1: #{tpu_custom_call.1} parent=0
    #allocation2 [shape = 'u8[16384]{0}', space=vmem, size = 0x4000, scoped, tag = 'output window, operand 0']
    #allocation3 [shape = 's32[2]{0}', space=sflag, size = 0x8, scoped, tag = 'scoped memory for tpu_custom_call.1']
    %6 = vsyncpa [#allocation3], 0
    %s7 = scalar_lea.sflag [#allocation3], 1
    %8 = vsyncpa %s7, 0
    loop: start=0, step=1, limit=8
    $region2: #{tpu_custom_call.1} parent=1 // loop_pre_header
      _
    $region3: #{tpu_custom_call.1} parent=1 // loop_header
      %s10 = sphi 0, %s14
      %p11 = scmp.ge.s32.totalorder %s10, 8
      %s20 = sphi 0, %s22
      %s23 = sphi 0, %s20
      %s24 = sphi 0, %s23
      %s40 = sphi 0, %s24
      %s46 = sphi 0, %s48
      %s49 = sphi 0, %s46
      %s50 = sphi 0, %s49
      %s66 = sphi 0, %s50
    $region4: #{tpu_custom_call.1} parent=1 // loop_header_branch
      %13 = sbr.rel (%p11) target = $region8
    $region5: #{tpu_custom_call.1} parent=1 // loop_body
      %s15 = ssub.s32 %s10, 1
      %s16 = ssub.s32 %s10, 2
      %s17 = sadd.s32 %s10, 1
      %s18 = ssub.s32 %s10, %s17
      %p19 = scmp.eq.s32.totalorder %s18, 0
      %s21 = sadd.s32 %s20, 1
      %s22 = scalar_select %p19, %s20, %s21
      %p25 = pneg %p19
      %p26 = scmp.eq.s32.totalorder %s10, 5
      %p27 = por %p25, %p26
      %p28 = scmp.ne.s32.totalorder %s20, %s23
      %p29 = scmp.eq.s32.totalorder %s10, 0
      %p30 = por %p28, %p29
      %p31 = scmp.ne.s32.totalorder %s20, %s23
      %p32 = scmp.eq.s32.totalorder %s15, 5
      %p33 = por %p31, %p32
      %p34 = scmp.ne.s32.totalorder %s23, %s24
      %p35 = scmp.eq.s32.totalorder %s15, 0
      %p36 = por %p34, %p35
      %p37 = scmp.ne.s32.totalorder %s23, %s24
      %p38 = scmp.eq.s32.totalorder %s16, 5
      %p39 = por %p37, %p38
      %p41 = scmp.ne.s32.totalorder %s24, %s40
      %p42 = scmp.eq.s32.totalorder %s16, 0
      %p43 = por %p41, %p42
      %s44 = ssub.s32 %s10, %s17
      %p45 = scmp.eq.s32.totalorder %s44, 0
      %s47 = sadd.s32 %s46, 1
      %s48 = scalar_select %p45, %s46, %s47
      %p51 = pneg %p45
      %p52 = scmp.eq.s32.totalorder %s10, 5
      %p53 = por %p51, %p52
      %p54 = scmp.ne.s32.totalorder %s46, %s49
      %p55 = scmp.eq.s32.totalorder %s10, 0
      %p56 = por %p54, %p55
      %p57 = scmp.ne.s32.totalorder %s46, %s49
      %p58 = scmp.eq.s32.totalorder %s15, 5
      %p59 = por %p57, %p58
      %p60 = scmp.ne.s32.totalorder %s49, %s50
      %p61 = scmp.eq.s32.totalorder %s15, 0
      %p62 = por %p60, %p61
      %p63 = scmp.ne.s32.totalorder %s49, %s50
      %p64 = scmp.eq.s32.totalorder %s16, 5
      %p65 = por %p63, %p64
      %p67 = scmp.ne.s32.totalorder %s50, %s66
      %p68 = scmp.eq.s32.totalorder %s16, 0
      %p69 = por %p67, %p68
      %p70 = scmp.le.s32.totalorder 1, %s10
      %p71 = scmp.lt.s32.totalorder %s10, 7
      %p72 = pnand %p70, %p71
      %p73 = pneg %p72
      // Predicated region
      $region9: #{tpu_custom_call.1} parent=5 // pred_check
        _
      $region10: #{tpu_custom_call.1} parent=5 // pred_check_branch
        %75 = sbr.rel (%p72) target = $region12
      $region11: #{tpu_custom_call.1} parent=5 // pred_region
        %s76 = ssub.s32 %s10, 1
      $region12: #{tpu_custom_call.1} parent=5 // pred_fallthru
        _
      %p77 = scmp.lt.s32.totalorder %s10, 6
      // Predicated region
      $region13: #{tpu_custom_call.1} parent=5 // pred_check
        %p78 = pneg %p77
      $region14: #{tpu_custom_call.1} parent=5 // pred_check_branch
        %80 = sbr.rel (%p78) target = $region16
      $region15: #{tpu_custom_call.1} parent=5 // pred_region
        // Predicated region
        $region17: #{tpu_custom_call.1} parent=15 // pred_check
          %p81 = pneg %p30
        $region18: #{tpu_custom_call.1} parent=15 // pred_check_branch
          %83 = sbr.rel (%p81) target = $region20
        $region19: #{tpu_custom_call.1} parent=15 // pred_region
          %p84 = scmp.lt.s32.totalorder %s10, 5
          %s85 = scalar_select %p84, %s10, 5
          %s86 = smul.addr %s85, 8
          %s87 = scalar_lea.vmem %s0, %s86
        $region20: #{tpu_custom_call.1} parent=15 // pred_fallthru
          _
      $region16: #{tpu_custom_call.1} parent=5 // pred_fallthru
        _
      %p88 = scmp.le.s32.totalorder 1, %s10
      %p89 = scmp.lt.s32.totalorder %s10, 7
      %p90 = pnand %p88, %p89
      %p91 = pneg %p90
      // Predicated region
      $region21: #{tpu_custom_call.1} parent=5 // pred_check
        _
      $region22: #{tpu_custom_call.1} parent=5 // pred_check_branch
        %93 = sbr.rel (%p90) target = $region24
      $region23: #{tpu_custom_call.1} parent=5 // pred_region
        %s94 = ssub.s32 %s10, 1
        %p95 = scmp.lt.s32.totalorder %s15, 5
        %s96 = scalar_select %p95, %s15, 5
        %s97 = smul.addr %s96, 8
        %s98 = scalar_lea.vmem %s0, %s97
        %p99 = pneg %p36
        %p100 = pneg %p33
        %p101 = pneg %p62
        %p102 = pneg %p59
        %s103 = sand.u32 %s49, 1
        %s104 = scalar_lea.sflag [#allocation3], %s103
        %s105 = sand.u32 %s49, 1
        %s106 = smul.addr %s105, 16
        %s107 = scalar_lea.vmem [#allocation2], %s106
        %p108 = scmp.lt.s32.totalorder %s15, 5
        %s109 = scalar_select %p108, %s15, 5
        %s110 = smul.addr %s109, 8
        %s111 = scalar_lea.vmem %s0, %s110
        %v112 = vlaneseq
        %v113 = vand.u32 %v112, 127
        %v114 = vadd.s32 %v113, 128
        %v115 = vcvt.s32.f32 %v113
        %v116 = vcvt.s32.f32 %v114
        %v117 = vadd.f32 %v115, 0.5
        %v118 = vadd.f32 %v116, 0.5
        %v119 = vrcp.pop 16.0
        %v120 = vmul.f32 %v117, %v119
        %v121 = vmul.f32 %v118, %v119
        %v122 = vfloor.f32 %v120
        %v123 = vfloor.f32 %v121
        %v124 = vmul.f32 %v122, 16.0
        %v125 = vmul.f32 %v123, 16.0
        %v126 = vsub.f32 %v115, %v124
        %v127 = vsub.f32 %v116, %v125
        %v128 = vsub.f32 %v126, 7.5
        %v129 = vsub.f32 %v127, 7.5
        %v130 = vmul.f32 %v128, %v119
        %v131 = vmul.f32 %v129, %v119
        %v132 = vsub.f32 %v122, 7.5
        %v133 = vsub.f32 %v123, 7.5
        %v134 = vsub.f32 0.0, %v132
        %v135 = vsub.f32 0.0, %v133
        %v136 = vmul.f32 %v134, %v119
        %v137 = vmul.f32 %v135, %v119
        %v138 = vld [vmem:[%s111] sm:$0xff]
        %140 = vset.pattern.permute.xlu0 0
        %141 = vperm.xlu0 %140, %v138
        %v142 = vpop.permute.xlu0 %141
        %v144 = vsub.f32 %v130, %v142
        %v145 = vsub.f32 %v131, %v142
        %146 = vset.pattern.permute.xlu0 1
        %147 = vperm.xlu0 %146, %v138
        %v148 = vpop.permute.xlu0 %147
        %v150 = vsub.f32 %v136, %v148
        %v151 = vsub.f32 %v137, %v148
        %152 = vset.pattern.permute.xlu0 4
        %153 = vperm.xlu0 %152, %v138
        %v154 = vpop.permute.xlu0 %153
        %v156 = vmul.f32 %v150, %v154
        %v157 = vmul.f32 %v151, %v154
        %158 = vset.pattern.permute.xlu0 5
        %159 = vperm.xlu0 %158, %v138
        %v160 = vpop.permute.xlu0 %159
        %v162 = vmul.f32 %v144, %v160
        %v163 = vmul.f32 %v145, %v160
        %v164 = vsub.f32 %v156, %v162
        %v165 = vsub.f32 %v157, %v163
        %v166 = vmul.f32 %v150, %v160
        %v167 = vmul.f32 %v151, %v160
        %v168 = vmul.f32 %v144, %v154
        %v169 = vmul.f32 %v145, %v154
        %v170 = vadd.f32 %v166, %v168
        %v171 = vadd.f32 %v167, %v169
        %172 = vset.pattern.permute.xlu0 2
        %173 = vperm.xlu0 %172, %v138
        %v174 = vpop.permute.xlu0 %173
        %v176 = vrcp.pop %v174
        %v177 = vmul.f32 %v170, %v176
        %v178 = vmul.f32 %v171, %v176
        %179 = vset.pattern.permute.xlu0 3
        %180 = vperm.xlu0 %179, %v138
        %v181 = vpop.permute.xlu0 %180
        %v183 = vrcp.pop %v181
        %v184 = vmul.f32 %v164, %v183
        %v185 = vmul.f32 %v165, %v183
        %v186 = vmul.f32 %v177, %v177
        %v187 = vmul.f32 %v178, %v178
        %v188 = vmul.f32 %v184, %v184
        %v189 = vmul.f32 %v185, %v185
        %v190 = vadd.f32 %v186, %v188
        %v191 = vadd.f32 %v187, %v189
        %v192 = vmul.f32 %v190, -0.5
        %v193 = vmul.f32 %v191, -0.5
        %v194 = vmul.f32 %v192, 1.442695
        %v195 = vpow.pop %v194
        %v196 = vmul.f32 %v193, 1.442695
        %v197 = vpow.pop %v196
        %v198 = vmul.f32 %v195, 0.5
        %v199 = vmul.f32 %v197, 0.5
        %v200 = vmul.f32 %v138, 6.2831855
        %202 = vset.pattern.permute.xlu0 6
        %203 = vperm.xlu0 %202, %v200
        %v204 = vpop.permute.xlu0 %203
        %v206 = vmul.f32 %v204, %v164
        %v207 = vmul.f32 %v204, %v165
        %208 = vset.pattern.permute.xlu0 7
        %209 = vperm.xlu0 %208, %v138
        %v210 = vpop.permute.xlu0 %209
        %v212 = vadd.f32 %v206, %v210
        %v213 = vadd.f32 %v207, %v210
        %v214 = vand.u32 2147483647, %v212
        %vm215 = vcmp.le.f32.partialorder %v214, 0.7853982
        %vm216 = vcmp.lt.s32.totalorder %v212, 0
        %v217 = vand.u32 %v212, 2139095040
        %v218 = vshrl.u32 %v217, 23
        %v219 = vsub.s32 %v218, 127
        %v220 = vand.u32 2147483647, %v212
        %v221 = vand.u32 %v220, 8388607
        %v222 = vor.u32 %v221, 8388608
        %v223 = vsub.s32 0, %v222
        %v224 = vadd.s32 %v219, 1
        %vm225 = vcmp.gt.s32.totalorder %v224, 0
        %v226 = vsel %vm225, %v224, 0
        %v227 = vshrl.u32 %v226, 5
        %v228 = vand.u32 %v226, 31
        %v229 = vsub.s32 32, %v228
        %v230 = vshrl.u32 683565275, %v229
        %v231 = vshll.u32 683565275, %v228
        %v232 = vshrl.u32 2475754826, %v229
        %v233 = vor.u32 %v231, %v232
        %v234 = vshll.u32 2475754826, %v228
        %v235 = vshrl.u32 2131351028, %v229
        %v236 = vor.u32 %v234, %v235
        %v237 = vshll.u32 2131351028, %v228
        %v238 = vshrl.u32 2102212464, %v229
        %v239 = vor.u32 %v237, %v238
        %v240 = vshll.u32 2102212464, %v228
        %v241 = vshrl.u32 920167782, %v229
        %v242 = vor.u32 %v240, %v241
        %v243 = vshll.u32 920167782, %v228
        %v244 = vshrl.u32 1326507024, %v229
        %v245 = vor.u32 %v243, %v244
        %vm246 = vcmp.lt.s32.totalorder %v227, 1
        %vm247 = vcmp.lt.s32.totalorder %v227, 2
        %vm248 = vcmp.lt.s32.totalorder %v227, 3
        %vm249 = vcmp.lt.s32.totalorder %v227, 4
        %v250 = vsel %vm246, %v230, %v233
        %v251 = vsel %vm249, %v239, 2102212464
        %v252 = vsel %vm248, %v236, %v251
        %v253 = vsel %vm247, %v250, %v252
        %v254 = vsel %vm246, %v233, %v236
        %v255 = vsel %vm249, %v242, 920167782
        %v256 = vsel %vm248, %v239, %v255
        %v257 = vsel %vm247, %v254, %v256
        %v258 = vsel %vm246, %v236, %v239
        %v259 = vsel %vm249, %v245, 1326507024
        %v260 = vsel %vm248, %v242, %v259
        %v261 = vsel %vm247, %v258, %v260
        %v262 = vshll.u32 %v222, 8
        %v263 = vmul.u32.u64.compose %v262, %v261
        %v264 = vextract.low.u32 %v263
        %v265 = vextract.high.u32 %v263
        %v266 = vmul.u32.u64.compose %v262, %v257
        %v267 = vextract.low.u32 %v266
        %v268 = vextract.high.u32 %v266
        %v269 = vmul.u32 %v262, %v253
        %v270 = vadd.s32 %v265, %v267
        %vm271 = vc.u32 %v265, %v267
        %v272 = vadd.s32 %v268, 1
        %v273 = vsel %vm271, %v272, %v268
        %v274 = vadd.s32 %v269, %v273
        %v275 = vadd.s32 %v274, 536870912
        %v276 = vshrl.u32 %v275, 30
        %v277 = vshll.u32 %v276, 30
        %v278 = vsub.s32 %v274, %v277
        %vm279 = vcmp.lt.s32.totalorder %v278, 0
        %v280 = vsub.s32 0, %v278
        %v281 = vsel %vm279, %v280, %v278
        %v282 = vclz %v281
        %v283 = vsub.s32 %v282, 2
        %vm284 = vcmp.gt.s32.totalorder 0, %v283
        %v285 = vsel %vm284, 0, %v283
        %v286 = vsub.s32 32, %v285
        %v287 = vshll.u32 %v278, %v285
        %v288 = vshrl.u32 %v270, %v286
        %v289 = vor.u32 %v287, %v288
        %v290 = vsub.s32 4294967266, %v285
        %v291 = vadd.s32 %v290, 127
        %v292 = vshll.u32 %v291, 23
        %v293 = vor.u32 4788187, %v292
        %v294 = vand.u32 2147483647, %v293
        %v296 = vcvt.s32.f32 %v289
        %v297 = vmul.f32 %v296, %v294
        %v298 = vxor.u32 %v297, 2147483648
        %v299 = vsel %vm216, %v298, %v297
        %v300 = vsub.s32 4, %v276
        %v301 = vsel %vm216, %v300, %v276
        %v302 = vsel %vm215, %v212, %v299
        %v303 = vsel %vm215, 0, %v301
        %v304 = vcosq.f32.pop %v302
        %v305 = vsinq.f32.pop %v302
        %vm306 = vweird.f32 %v212
        %v307 = vand.u32 %v303, 3
        %vm308 = vcmp.lt.s32.totalorder %v307, 2
        %vm309 = vcmp.eq.s32.totalorder %v307, 0
        %v310 = vxor.u32 %v305, 2147483648
        %v311 = vsel %vm309, %v304, %v310
        %vm312 = vcmp.eq.s32.totalorder %v307, 2
        %v313 = vxor.u32 %v304, 2147483648
        %v314 = vsel %vm312, %v313, %v305
        %v315 = vsel %vm308, %v311, %v314
        %v316 = vsel %vm306, nan, %v315
        %v317 = vand.u32 2147483647, %v213
        %vm318 = vcmp.le.f32.partialorder %v317, 0.7853982
        %vm319 = vcmp.lt.s32.totalorder %v213, 0
        %v320 = vand.u32 %v213, 2139095040
        %v321 = vshrl.u32 %v320, 23
        %v322 = vsub.s32 %v321, 127
        %v323 = vand.u32 2147483647, %v213
        %v324 = vand.u32 %v323, 8388607
        %v325 = vor.u32 %v324, 8388608
        %v326 = vsub.s32 0, %v325
        %v327 = vadd.s32 %v322, 1
        %vm328 = vcmp.gt.s32.totalorder %v327, 0
        %v329 = vsel %vm328, %v327, 0
        %v330 = vshrl.u32 %v329, 5
        %v331 = vand.u32 %v329, 31
        %v332 = vsub.s32 32, %v331
        %v333 = vshrl.u32 683565275, %v332
        %v334 = vshll.u32 683565275, %v331
        %v335 = vshrl.u32 2475754826, %v332
        %v336 = vor.u32 %v334, %v335
        %v337 = vshll.u32 2475754826, %v331
        %v338 = vshrl.u32 2131351028, %v332
        %v339 = vor.u32 %v337, %v338
        %v340 = vshll.u32 2131351028, %v331
        %v341 = vshrl.u32 2102212464, %v332
        %v342 = vor.u32 %v340, %v341
        %v343 = vshll.u32 2102212464, %v331
        %v344 = vshrl.u32 920167782, %v332
        %v345 = vor.u32 %v343, %v344
        %v346 = vshll.u32 920167782, %v331
        %v347 = vshrl.u32 1326507024, %v332
        %v348 = vor.u32 %v346, %v347
        %vm349 = vcmp.lt.s32.totalorder %v330, 1
        %vm350 = vcmp.lt.s32.totalorder %v330, 2
        %vm351 = vcmp.lt.s32.totalorder %v330, 3
        %vm352 = vcmp.lt.s32.totalorder %v330, 4
        %v353 = vsel %vm349, %v333, %v336
        %v354 = vsel %vm352, %v342, 2102212464
        %v355 = vsel %vm351, %v339, %v354
        %v356 = vsel %vm350, %v353, %v355
        %v357 = vsel %vm349, %v336, %v339
        %v358 = vsel %vm352, %v345, 920167782
        %v359 = vsel %vm351, %v342, %v358
        %v360 = vsel %vm350, %v357, %v359
        %v361 = vsel %vm349, %v339, %v342
        %v362 = vsel %vm352, %v348, 1326507024
        %v363 = vsel %vm351, %v345, %v362
        %v364 = vsel %vm350, %v361, %v363
        %v365 = vshll.u32 %v325, 8
        %v366 = vmul.u32.u64.compose %v365, %v364
        %v367 = vextract.low.u32 %v366
        %v368 = vextract.high.u32 %v366
        %v369 = vmul.u32.u64.compose %v365, %v360
        %v370 = vextract.low.u32 %v369
        %v371 = vextract.high.u32 %v369
        %v372 = vmul.u32 %v365, %v356
        %v373 = vadd.s32 %v368, %v370
        %vm374 = vc.u32 %v368, %v370
        %v375 = vadd.s32 %v371, 1
        %v376 = vsel %vm374, %v375, %v371
        %v377 = vadd.s32 %v372, %v376
        %v378 = vadd.s32 %v377, 536870912
        %v379 = vshrl.u32 %v378, 30
        %v380 = vshll.u32 %v379, 30
        %v381 = vsub.s32 %v377, %v380
        %vm382 = vcmp.lt.s32.totalorder %v381, 0
        %v383 = vsub.s32 0, %v381
        %v384 = vsel %vm382, %v383, %v381
        %v385 = vclz %v384
        %v386 = vsub.s32 %v385, 2
        %vm387 = vcmp.gt.s32.totalorder 0, %v386
        %v388 = vsel %vm387, 0, %v386
        %v389 = vsub.s32 32, %v388
        %v390 = vshll.u32 %v381, %v388
        %v391 = vshrl.u32 %v373, %v389
        %v392 = vor.u32 %v390, %v391
        %v393 = vsub.s32 4294967266, %v388
        %v394 = vadd.s32 %v393, 127
        %v395 = vshll.u32 %v394, 23
        %v396 = vor.u32 4788187, %v395
        %v397 = vand.u32 2147483647, %v396
        %v399 = vcvt.s32.f32 %v392
        %v400 = vmul.f32 %v399, %v397
        %v401 = vxor.u32 %v400, 2147483648
        %v402 = vsel %vm319, %v401, %v400
        %v403 = vsub.s32 4, %v379
        %v404 = vsel %vm319, %v403, %v379
        %v405 = vsel %vm318, %v213, %v402
        %v406 = vsel %vm318, 0, %v404
        %v407 = vcosq.f32.pop %v405
        %v408 = vsinq.f32.pop %v405
        %vm409 = vweird.f32 %v213
        %v410 = vand.u32 %v406, 3
        %vm411 = vcmp.lt.s32.totalorder %v410, 2
        %vm412 = vcmp.eq.s32.totalorder %v410, 0
        %v413 = vxor.u32 %v408, 2147483648
        %v414 = vsel %vm412, %v407, %v413
        %vm415 = vcmp.eq.s32.totalorder %v410, 2
        %v416 = vxor.u32 %v407, 2147483648
        %v417 = vsel %vm415, %v416, %v408
        %v418 = vsel %vm411, %v414, %v417
        %v419 = vsel %vm409, nan, %v418
        %v420 = vmul.f32 %v198, %v316
        %v421 = vmul.f32 %v199, %v419
        %422 = vst [vmem:[%s107] sm:$0xff] %v420
        %423 = vst [vmem:[%s107 + $0x8] sm:$0xff] %v421
        %s424 = sand.u32 %s49, 1
        %s425 = scalar_lea.sflag [#allocation3], %s424
        %s426 = sand.u32 %s49, 1
        %s427 = smul.addr %s426, 16
        %s428 = scalar_lea.vmem [#allocation2], %s427
        // Predicated region
        $region25: #{tpu_custom_call.1} parent=23 // pred_check
          %p429 = pneg %p59
        $region26: #{tpu_custom_call.1} parent=23 // pred_check_branch
          %431 = sbr.rel (%p429) target = $region28
        $region27: #{tpu_custom_call.1} parent=23 // pred_region
          %s433 = ssub.s32 256, 256
          %434 = vsyncadd %s425, %s433
          %s435 = smul.addr %s15, 2
          %s436 = smul.addr %s435, 128
          %s437 = scalar_lea.hbm %s1, %s436
          %s439 = sshll.u32 %s428, 4
          %s440 = int_to_ptr.vmem [resolvable:$true] %s439
          %442 = dma.vmem_to_hbm [thread:$0]  %s440, 256, %s437, %s425
        $region28: #{tpu_custom_call.1} parent=23 // pred_fallthru
          _
      $region24: #{tpu_custom_call.1} parent=5 // pred_fallthru
        _
      %p443 = scmp.le.s32.totalorder 2, %s10
      // Predicated region
      $region29: #{tpu_custom_call.1} parent=5 // pred_check
        %p444 = pneg %p443
      $region30: #{tpu_custom_call.1} parent=5 // pred_check_branch
        %446 = sbr.rel (%p444) target = $region32
      $region31: #{tpu_custom_call.1} parent=5 // pred_region
        %s447 = ssub.s32 %s10, 2
        // Predicated region
        $region33: #{tpu_custom_call.1} parent=31 // pred_check
          %p448 = pneg %p65
        $region34: #{tpu_custom_call.1} parent=31 // pred_check_branch
          %450 = sbr.rel (%p448) target = $region36
        $region35: #{tpu_custom_call.1} parent=31 // pred_region
          %s451 = sand.u32 %s50, 1
          %s452 = scalar_lea.sflag [#allocation3], %s451
          %s453 = sand.u32 %s50, 1
          %s454 = smul.addr %s453, 16
          %s455 = scalar_lea.vmem [#allocation2], %s454
          %456 = dma.done %s452, 256
        $region36: #{tpu_custom_call.1} parent=31 // pred_fallthru
          _
      $region32: #{tpu_custom_call.1} parent=5 // pred_fallthru
        _
    $region6: #{tpu_custom_call.1} parent=1 // loop_footer
      %s14 = sadd.s32 1, %s10
    $region7: #{tpu_custom_call.1} parent=1 // loop_footer_branch
      %9 = sbr.rel target = $region3
    $region8: #{tpu_custom_call.1} parent=1 // loop_exit
      _
    %457 = vsyncpa [#allocation3], 1
    %s458 = scalar_lea.sflag [#allocation3], 1
    %459 = vsyncpa %s458, 1

</llo_original>
